<compile_context>
chip_gen: v7x
topology: tpu7x:2x2x1
jax: 0.10.0
libtpu: 0.0.40
codegen_flags: <defaults>
</compile_context>

<pallas_src>
import jax
import jax.numpy as jnp
from jax.experimental import pallas as pl
from jax.experimental.pallas import tpu as pltpu


def _vmem_capacity_bytes():
    """Physical VMEM of the local TPU; conservative (v7x = 64 MiB) fallback."""
    try:
        info = pltpu.get_tpu_info()
        cap = int(getattr(info, "vmem_capacity_bytes", 0) or 0)
        if cap > 0:
            return cap
    except Exception:
        pass
    return 64 * 1024 * 1024


def _round_up(x, m):
    return ((x + m - 1) // m) * m


def _make_kernels(hw_total, tm, ragged):
    """Kernel factory; hw_total / tm / ragged are trace-time constants."""

    def _finalize(y, b_ref, o_ref):
        y = y + b_ref[...]
        if ragged:
            # Mask out-of-range columns of the last spatial tile so no garbage
            # is staged for writeback (Pallas also clips the output DMA itself).
            col = pl.program_id(1) * tm + jax.lax.broadcasted_iota(
                jnp.int32, y.shape, 1)
            y = jnp.where(col < hw_total, y, 0.0)
        o_ref[...] = jnp.maximum(y, 0.0).astype(o_ref.dtype)

    def kernel_mxu(x_ref, w_ref, b_ref, o_ref):
        # out[C_out, m] = W[C_out, C_in] @ x[C_in, m] on the MXU, f32 accumulate.
        y = jnp.dot(w_ref[...], x_ref[...], preferred_element_type=jnp.float32)
        _finalize(y, b_ref, o_ref)

    def kernel_vpu(x_ref, w_ref, b_ref, o_ref):
        # Tiny-channel path: unrolled outer-product FMA on the VPU.  Two
        # interleaved accumulators break the serial add dependence chain.
        x = x_ref[...].astype(jnp.float32)
        w = w_ref[...].astype(jnp.float32)
        c_out, c_in = w.shape
        cols = x.shape[-1]
        acc0 = jnp.zeros((c_out, cols), jnp.float32)
        acc1 = jnp.zeros((c_out, cols), jnp.float32)
        for k in range(0, c_in - 1, 2):
            acc0 = acc0 + w[:, k:k + 1] * x[k:k + 1, :]
            acc1 = acc1 + w[:, k + 1:k + 2] * x[k + 1:k + 2, :]
        if c_in % 2:
            acc0 = acc0 + w[:, c_in - 1:c_in] * x[c_in - 1:c_in, :]
        _finalize(acc0 + acc1, b_ref, o_ref)

    return kernel_vpu, kernel_mxu


def depthwise_conv_block(x_nchw, dw_weight, pw_weight, gamma, beta,
                         running_mean, running_var, eps=4e-5,
                         activation_dtype=None):
    """Forward of DepthwiseConvBlock with kernel_size=1, stride=1, padding=0.

    x_nchw:    (N, C_in, H, W)
    dw_weight: (C_in, 1, 1, 1)      depthwise conv weight (groups=C_in, k=1)
    pw_weight: (C_out, C_in, 1, 1)  pointwise conv weight
    gamma, beta, running_mean, running_var: (C_out,)
    activation_dtype: None (f32) or jnp.bfloat16 to halve activation HBM bytes.
    returns:   (N, C_out, H, W)
    """
    N, C_in, H, W = x_nchw.shape
    C_out = pw_weight.shape[0]
    HW = H * W
    out_dtype = x_nchw.dtype

    # Folding below is only valid for kernel_size=1 depthwise conv.
    assert dw_weight.shape == (C_in, 1, 1, 1), "only k=1 depthwise is supported"

    # --- Fold depthwise scale + BN scale into the pointwise weight (trace time) ---
    inv_std = 1.0 / jnp.sqrt(running_var.astype(jnp.float32) + eps)
    scale = gamma.astype(jnp.float32) * inv_std                       # (C_out,)
    w_folded = (pw_weight.reshape(C_out, C_in).astype(jnp.float32)
                * dw_weight.reshape(1, C_in).astype(jnp.float32)
                * scale.reshape(C_out, 1))                            # (C_out, C_in)
    bias = (beta.astype(jnp.float32)
            - running_mean.astype(jnp.float32) * scale).reshape(C_out, 1)

    act_dtype = (jnp.dtype(activation_dtype) if activation_dtype is not None
                 else jnp.dtype(jnp.float32))
    if act_dtype == jnp.dtype(jnp.bfloat16):
        w_folded = w_folded.astype(jnp.bfloat16)   # bias + accumulation stay f32

    # --- Channel-major layout: NCHW -> (N, C_in, H*W) is a pure reshape ---
    x = x_nchw.reshape(N, C_in, HW).astype(act_dtype)

    # --- Lane tile from the per-generation VMEM budget ---------------------
    act_bytes = act_dtype.itemsize
    out_bytes = jnp.dtype(out_dtype).itemsize
    w_bytes = w_folded.dtype.itemsize
    vmem_cap = _vmem_capacity_bytes()
    tile_budget = vmem_cap // 2                               # pipelined working set
    vmem_limit = max(min(vmem_cap - 8 * 1024 * 1024, (vmem_cap * 3) // 4),
                     32 * 1024 * 1024)

    fixed = 2 * C_out * C_in * w_bytes + 2 * C_out * 4        # weight + bias buffers
    per_col = (2 * C_in * act_bytes                           # double-buffered input
               + 2 * C_out * out_bytes                        # double-buffered output
               + 2 * C_out * 4)                               # f32 intermediates
    tm = max(tile_budget - fixed, 0) // max(per_col, 1)
    tm = max(128, min((tm // 128) * 128, 65536))
    tm = min(tm, _round_up(HW, 128))

    # v7x has 2 TensorCores per chip: guarantee >= 2 parallel grid steps.
    if N * pl.cdiv(HW, tm) < 2 and HW > 128:
        tm = _round_up(pl.cdiv(HW, 2), 128)

    grid = (N, pl.cdiv(HW, tm))
    ragged = (HW % tm) != 0

    # --- VPU vs MXU crossover: VPU only when the FMA work hides under DMA ---
    use_vpu = (C_in * C_out <= 6 * (C_in + C_out)) and (C_in <= 32)
    kernel_vpu, kernel_mxu = _make_kernels(HW, tm, ragged)
    kernel = kernel_vpu if use_vpu else kernel_mxu

    out = pl.pallas_call(
        kernel,
        out_shape=jax.ShapeDtypeStruct((N, C_out, HW), out_dtype),
        grid_spec=pltpu.PrefetchScalarGridSpec(
            num_scalar_prefetch=0,
            grid=grid,
            in_specs=[
                pl.BlockSpec((None, C_in, tm), lambda n, j: (n, 0, j)),  # x tile (lane-dense)
                pl.BlockSpec((C_out, C_in), lambda n, j: (0, 0)),        # folded weight (resident)
                pl.BlockSpec((C_out, 1), lambda n, j: (0, 0)),           # folded bias (resident)
            ],
            out_specs=pl.BlockSpec((None, C_out, tm), lambda n, j: (n, 0, j)),
        ),
        compiler_params=pltpu.CompilerParams(
            dimension_semantics=("parallel", "parallel"),
            vmem_limit_bytes=int(vmem_limit),
        ),
    )(x, w_folded, bias)

    return out.reshape(N, C_out, H, W)


if __name__ == "__main__":
    key = jax.random.PRNGKey(0)
    k_x, k_dw, k_pw, k_g, k_b, k_m, k_v = jax.random.split(key, 7)

    N, C_in, C_out, H, W = 2, 4, 8, 16, 16
    eps = 4e-5  # matches nn.BatchNorm2d(out_channels, momentum=0.9997, eps=4e-05)

    x = jax.random.normal(k_x, (N, C_in, H, W), dtype=jnp.float32)

    # Deterministic synthetic parameters (shapes match nn.Conv2d / nn.BatchNorm2d)
    dw_weight = jax.random.normal(k_dw, (C_in, 1, 1, 1), dtype=jnp.float32) * 0.5
    pw_weight = jax.random.normal(k_pw, (C_out, C_in, 1, 1), dtype=jnp.float32) * 0.5
    gamma = 1.0 + 0.1 * jax.random.normal(k_g, (C_out,), dtype=jnp.float32)
    beta = 0.1 * jax.random.normal(k_b, (C_out,), dtype=jnp.float32)
    running_mean = 0.1 * jax.random.normal(k_m, (C_out,), dtype=jnp.float32)
    running_var = jnp.abs(jax.random.normal(k_v, (C_out,), dtype=jnp.float32)) + 0.5

    out = depthwise_conv_block(x, dw_weight, pw_weight, gamma, beta,
                               running_mean, running_var, eps=eps)
    out = jax.block_until_ready(out)

    # Reference check in plain JAX (unfused math, no Pallas)
    x_flat = jnp.transpose(x, (0, 2, 3, 1)).reshape(-1, C_in)
    ref = (x_flat * dw_weight.reshape(1, C_in)) @ pw_weight.reshape(C_out, C_in).T
    inv_std = 1.0 / jnp.sqrt(running_var + eps)
    ref = ref * (gamma * inv_std) + (beta - running_mean * gamma * inv_std)
    ref = jnp.maximum(ref, 0.0).reshape(N, H, W, C_out).transpose(0, 3, 1, 2)

    assert out.shape == (N, C_out, H, W)
    assert jnp.allclose(out, ref, atol=2e-5, rtol=1e-5), float(jnp.max(jnp.abs(out - ref)))

    print("KERNEL_OK")
</pallas_src>

<mosaic_0001>
module attributes {stable_mosaic.version = 11 : i64} {
  func.func @kernel_vpu(%arg0: i32, %arg1: i32, %arg2: memref<1x4x256xf32, #tpu.memory_space<vmem>>, %arg3: memref<8x4xf32, #tpu.memory_space<vmem>>, %arg4: memref<8x1xf32, #tpu.memory_space<vmem>>, %arg5: memref<1x8x256xf32, #tpu.memory_space<vmem>>) attributes {dimension_semantics = [#tpu.dimension_semantics<parallel>, #tpu.dimension_semantics<parallel>], iteration_bounds = array<i64: 2, 1>, scalar_prefetch = 0 : i64, scratch_operands = 0 : i64, tpu.core_type = #tpu.core_type<tc>, window_params = [{transform_indices = @transform_0, window_bounds = array<i64: 1, 4, 256>}, {pipeline_mode = #tpu.pipeline_mode<synchronous>, transform_indices = @transform_1, window_bounds = array<i64: 8, 4>}, {pipeline_mode = #tpu.pipeline_mode<synchronous>, transform_indices = @transform_2, window_bounds = array<i64: 8, 1>}, {transform_indices = @transform_3, window_bounds = array<i64: 1, 8, 256>}]} {
    %c0 = arith.constant 0 : index
    %c0_0 = arith.constant 0 : index
    %c0_1 = arith.constant 0 : index
    %0 = vector.load %arg2[%c0, %c0_0, %c0_1] : memref<1x4x256xf32, #tpu.memory_space<vmem>>, vector<1x4x256xf32>
    %1 = vector.shape_cast %0 : vector<1x4x256xf32> to vector<4x256xf32>
    %c0_2 = arith.constant 0 : index
    %c0_3 = arith.constant 0 : index
    %2 = vector.load %arg3[%c0_2, %c0_3] : memref<8x4xf32, #tpu.memory_space<vmem>>, vector<8x4xf32>
    %cst = arith.constant 0.000000e+00 : f32
    %3 = vector.broadcast %cst : f32 to vector<8x256xf32>
    %cst_4 = arith.constant 0.000000e+00 : f32
    %4 = vector.broadcast %cst_4 : f32 to vector<8x256xf32>
    %5 = vector.extract_strided_slice %2 {offsets = [0, 0], sizes = [8, 1], strides = [1, 1]} : vector<8x4xf32> to vector<8x1xf32>
    %6 = vector.extract_strided_slice %1 {offsets = [0, 0], sizes = [1, 256], strides = [1, 1]} : vector<4x256xf32> to vector<1x256xf32>
    %7 = vector.broadcast %5 : vector<8x1xf32> to vector<8x256xf32>
    %8 = vector.broadcast %6 : vector<1x256xf32> to vector<8x256xf32>
    %9 = arith.mulf %7, %8 : vector<8x256xf32>
    %10 = arith.addf %3, %9 : vector<8x256xf32>
    %11 = vector.extract_strided_slice %2 {offsets = [0, 1], sizes = [8, 1], strides = [1, 1]} : vector<8x4xf32> to vector<8x1xf32>
    %12 = vector.extract_strided_slice %1 {offsets = [1, 0], sizes = [1, 256], strides = [1, 1]} : vector<4x256xf32> to vector<1x256xf32>
    %13 = vector.broadcast %11 : vector<8x1xf32> to vector<8x256xf32>
    %14 = vector.broadcast %12 : vector<1x256xf32> to vector<8x256xf32>
    %15 = arith.mulf %13, %14 : vector<8x256xf32>
    %16 = arith.addf %4, %15 : vector<8x256xf32>
    %17 = vector.extract_strided_slice %2 {offsets = [0, 2], sizes = [8, 1], strides = [1, 1]} : vector<8x4xf32> to vector<8x1xf32>
    %18 = vector.extract_strided_slice %1 {offsets = [2, 0], sizes = [1, 256], strides = [1, 1]} : vector<4x256xf32> to vector<1x256xf32>
    %19 = vector.broadcast %17 : vector<8x1xf32> to vector<8x256xf32>
    %20 = vector.broadcast %18 : vector<1x256xf32> to vector<8x256xf32>
    %21 = arith.mulf %19, %20 : vector<8x256xf32>
    %22 = arith.addf %10, %21 : vector<8x256xf32>
    %23 = vector.extract_strided_slice %2 {offsets = [0, 3], sizes = [8, 1], strides = [1, 1]} : vector<8x4xf32> to vector<8x1xf32>
    %24 = vector.extract_strided_slice %1 {offsets = [3, 0], sizes = [1, 256], strides = [1, 1]} : vector<4x256xf32> to vector<1x256xf32>
    %25 = vector.broadcast %23 : vector<8x1xf32> to vector<8x256xf32>
    %26 = vector.broadcast %24 : vector<1x256xf32> to vector<8x256xf32>
    %27 = arith.mulf %25, %26 : vector<8x256xf32>
    %28 = arith.addf %16, %27 : vector<8x256xf32>
    %29 = arith.addf %22, %28 : vector<8x256xf32>
    %c0_5 = arith.constant 0 : index
    %c0_6 = arith.constant 0 : index
    %30 = vector.load %arg4[%c0_5, %c0_6] : memref<8x1xf32, #tpu.memory_space<vmem>>, vector<8x1xf32>
    %31 = vector.broadcast %30 : vector<8x1xf32> to vector<8x256xf32>
    %32 = arith.addf %29, %31 : vector<8x256xf32>
    %cst_7 = arith.constant 0.000000e+00 : f32
    %33 = vector.broadcast %cst_7 : f32 to vector<8x256xf32>
    %34 = arith.maximumf %32, %33 : vector<8x256xf32>
    %c0_8 = arith.constant 0 : index
    %c0_9 = arith.constant 0 : index
    %c0_10 = arith.constant 0 : index
    %35 = vector.load %arg5[%c0_8, %c0_9, %c0_10] : memref<1x8x256xf32, #tpu.memory_space<vmem>>, vector<1x8x256xf32>
    %36 = vector.shape_cast %35 : vector<1x8x256xf32> to vector<8x256xf32>
    %37 = vector.shape_cast %34 : vector<8x256xf32> to vector<1x8x256xf32>
    tpu.vector_store %arg5[%c0_8, %c0_9, %c0_10], %37 {strides = array<i32>} : memref<1x8x256xf32, #tpu.memory_space<vmem>>, vector<1x8x256xf32>,
    return
  }
  func.func @transform_0(%arg0: i32, %arg1: i32) -> (i32, i32, i32) {
    %c0_i32 = arith.constant 0 : i32
    %c0_i32_0 = arith.constant 0 : i32
    return %arg0, %c0_i32, %arg1 : i32, i32, i32
  }
  func.func @transform_1(%arg0: i32, %arg1: i32) -> (i32, i32) {
    %c0_i32 = arith.constant 0 : i32
    %c0_i32_0 = arith.constant 0 : i32
    %c0_i32_1 = arith.constant 0 : i32
    return %c0_i32, %c0_i32_0 : i32, i32
  }
  func.func @transform_2(%arg0: i32, %arg1: i32) -> (i32, i32) {
    %c0_i32 = arith.constant 0 : i32
    %c0_i32_0 = arith.constant 0 : i32
    %c0_i32_1 = arith.constant 0 : i32
    return %c0_i32, %c0_i32_0 : i32, i32
  }
  func.func @transform_3(%arg0: i32, %arg1: i32) -> (i32, i32, i32) {
    %c0_i32 = arith.constant 0 : i32
    %c0_i32_0 = arith.constant 0 : i32
    return %arg0, %c0_i32, %arg1 : i32, i32, i32
  }
}

</mosaic_0001>

<llo_original>
// kernel: tpu_custom_call.1
$region0: #{tpu_custom_call.1}
  #allocation0 [shape = 'u32[]', space=smem, size = 0x4, offset = 0x4, fixed_abs, tag = 'smem constant byte address 0x4 - core index']
  #allocation1 [shape = 'u32[144,128]{1,0:T(1,128)}', space=vmem, size = 0x12000, scoped, tag = 'internal scratch']
  %s0 = inlined_call_operand.vmem [shape: f32[2,4,256], index: 0, kind: input, shape index: {}]
  %s1 = inlined_call_operand.vmem [shape: f32[8,4], index: 1, kind: input, shape index: {}]
  %s2 = inlined_call_operand.vmem [shape: f32[8,1], index: 2, kind: input, shape index: {}]
  %s3 = inlined_call_operand.hbm [shape: f32[2,8,256], index: 3, kind: output, shape index: {}]
  %s4 = sld [smem:[#allocation0]]
  $region45: #{tpu_custom_call.1} parent=0
    _
  %s6 = ssub.s32 1, %s4
  %s7 = scalar_select 0, %s6, %s4
  $region1: #{tpu_custom_call.1} parent=0
    #allocation2 [shape = 'u8[16384]{0}', space=vmem, size = 0x4000, scoped, tag = 'output window, operand 0']
    #allocation3 [shape = 's32[2]{0}', space=sflag, size = 0x8, scoped, tag = 'scoped memory for tpu_custom_call.1']
    %8 = vsyncpa [#allocation3], 0
    %s9 = scalar_lea.sflag [#allocation3], 1
    %10 = vsyncpa %s9, 0
    loop: start=0, step=1, limit=4
    $region2: #{tpu_custom_call.1} parent=1 // loop_pre_header
      _
    $region3: #{tpu_custom_call.1} parent=1 // loop_header
      %s12 = sphi 0, %s16
      %p13 = scmp.ge.s32.totalorder %s12, 4
      %s19 = sphi 0, %s31
      %s20 = sphi 0, %s27
      %s21 = sphi 0, %s19
      %s22 = sphi 0, %s20
      %s23 = sphi 0, %s21
      %s24 = sphi 0, %s22
      %s36 = sphi 0, %s38
      %s39 = sphi 0, %s36
      %s40 = sphi 0, %s39
      %s56 = sphi 0, %s40
      %s60 = sphi 0, %s60
      %s62 = sphi 0, %s60
      %s63 = sphi 0, %s62
      %s77 = sphi 0, %s63
      %s81 = sphi 0, %s81
      %s83 = sphi 0, %s81
      %s84 = sphi 0, %s83
      %s98 = sphi 0, %s84
      %s106 = sphi 0, %s108
      %s109 = sphi 0, %s106
      %s110 = sphi 0, %s109
      %s126 = sphi 0, %s110
    $region4: #{tpu_custom_call.1} parent=1 // loop_header_branch
      %15 = sbr.rel (%p13) target = $region8
    $region5: #{tpu_custom_call.1} parent=1 // loop_body
      %s17 = ssub.s32 %s12, 1
      %s18 = ssub.s32 %s12, 2
      %s25 = sadd.s32 1, %s20
      %p26 = scmp.ge.s32.totalorder %s25, 1
      %s27 = scalar_select %p26, 0, %s25
      %s28 = sadd.s32 1, %s19
      %s29 = scalar_select %p26, %s28, %s19
      %p30 = scmp.ge.s32.totalorder %s29, 2
      %s31 = scalar_select %p30, 0, %s29
      %s32 = ssub.s32 %s19, %s31
      %s33 = ssub.s32 %s20, %s27
      %s34 = sor.u32 %s32, %s33
      %p35 = scmp.eq.s32.totalorder %s34, 0
      %s37 = sadd.s32 %s36, 1
      %s38 = scalar_select %p35, %s36, %s37
      %p41 = pneg %p35
      %p42 = scmp.eq.s32.totalorder %s12, 1
      %p43 = por %p41, %p42
      %p44 = scmp.ne.s32.totalorder %s36, %s39
      %p45 = scmp.eq.s32.totalorder %s12, 0
      %p46 = por %p44, %p45
      %p47 = scmp.ne.s32.totalorder %s36, %s39
      %p48 = scmp.eq.s32.totalorder %s17, 1
      %p49 = por %p47, %p48
      %p50 = scmp.ne.s32.totalorder %s39, %s40
      %p51 = scmp.eq.s32.totalorder %s17, 0
      %p52 = por %p50, %p51
      %p53 = scmp.ne.s32.totalorder %s39, %s40
      %p54 = scmp.eq.s32.totalorder %s18, 1
      %p55 = por %p53, %p54
      %p57 = scmp.ne.s32.totalorder %s40, %s56
      %p58 = scmp.eq.s32.totalorder %s18, 0
      %p59 = por %p57, %p58
      %s61 = sadd.s32 %s60, 1
      %p64 = scmp.eq.s32.totalorder %s12, 1
      %p65 = scmp.ne.s32.totalorder %s60, %s62
      %p66 = scmp.eq.s32.totalorder %s12, 0
      %p67 = por %p65, %p66
      %p68 = scmp.ne.s32.totalorder %s60, %s62
      %p69 = scmp.eq.s32.totalorder %s17, 1
      %p70 = por %p68, %p69
      %p71 = scmp.ne.s32.totalorder %s62, %s63
      %p72 = scmp.eq.s32.totalorder %s17, 0
      %p73 = por %p71, %p72
      %p74 = scmp.ne.s32.totalorder %s62, %s63
      %p75 = scmp.eq.s32.totalorder %s18, 1
      %p76 = por %p74, %p75
      %p78 = scmp.ne.s32.totalorder %s63, %s77
      %p79 = scmp.eq.s32.totalorder %s18, 0
      %p80 = por %p78, %p79
      %s82 = sadd.s32 %s81, 1
      %p85 = scmp.eq.s32.totalorder %s12, 1
      %p86 = scmp.ne.s32.totalorder %s81, %s83
      %p87 = scmp.eq.s32.totalorder %s12, 0
      %p88 = por %p86, %p87
      %p89 = scmp.ne.s32.totalorder %s81, %s83
      %p90 = scmp.eq.s32.totalorder %s17, 1
      %p91 = por %p89, %p90
      %p92 = scmp.ne.s32.totalorder %s83, %s84
      %p93 = scmp.eq.s32.totalorder %s17, 0
      %p94 = por %p92, %p93
      %p95 = scmp.ne.s32.totalorder %s83, %s84
      %p96 = scmp.eq.s32.totalorder %s18, 1
      %p97 = por %p95, %p96
      %p99 = scmp.ne.s32.totalorder %s84, %s98
      %p100 = scmp.eq.s32.totalorder %s18, 0
      %p101 = por %p99, %p100
      %s102 = ssub.s32 %s19, %s31
      %s103 = ssub.s32 %s20, %s27
      %s104 = sor.u32 %s102, %s103
      %p105 = scmp.eq.s32.totalorder %s104, 0
      %s107 = sadd.s32 %s106, 1
      %s108 = scalar_select %p105, %s106, %s107
      %p111 = pneg %p105
      %p112 = scmp.eq.s32.totalorder %s12, 1
      %p113 = por %p111, %p112
      %p114 = scmp.ne.s32.totalorder %s106, %s109
      %p115 = scmp.eq.s32.totalorder %s12, 0
      %p116 = por %p114, %p115
      %p117 = scmp.ne.s32.totalorder %s106, %s109
      %p118 = scmp.eq.s32.totalorder %s17, 1
      %p119 = por %p117, %p118
      %p120 = scmp.ne.s32.totalorder %s109, %s110
      %p121 = scmp.eq.s32.totalorder %s17, 0
      %p122 = por %p120, %p121
      %p123 = scmp.ne.s32.totalorder %s109, %s110
      %p124 = scmp.eq.s32.totalorder %s18, 1
      %p125 = por %p123, %p124
      %p127 = scmp.ne.s32.totalorder %s110, %s126
      %p128 = scmp.eq.s32.totalorder %s18, 0
      %p129 = por %p127, %p128
      %p130 = scmp.le.s32.totalorder 1, %s12
      %p131 = scmp.lt.s32.totalorder %s12, 3
      %p132 = pnand %p130, %p131
      %p133 = pneg %p132
      // Predicated region
      $region9: #{tpu_custom_call.1} parent=5 // pred_check
        _
      $region10: #{tpu_custom_call.1} parent=5 // pred_check_branch
        %135 = sbr.rel (%p132) target = $region12
      $region11: #{tpu_custom_call.1} parent=5 // pred_region
        %s136 = ssub.s32 %s12, 1
        // Predicated region
        $region13: #{tpu_custom_call.1} parent=11 // pred_check
          %p137 = pneg %p73
        $region14: #{tpu_custom_call.1} parent=11 // pred_check_branch
          %139 = sbr.rel (%p137) target = $region16
        $region15: #{tpu_custom_call.1} parent=11 // pred_region
          _
        $region16: #{tpu_custom_call.1} parent=11 // pred_fallthru
          _
        // Predicated region
        $region17: #{tpu_custom_call.1} parent=11 // pred_check
          %p140 = pneg %p94
        $region18: #{tpu_custom_call.1} parent=11 // pred_check_branch
          %142 = sbr.rel (%p140) target = $region20
        $region19: #{tpu_custom_call.1} parent=11 // pred_region
          _
        $region20: #{tpu_custom_call.1} parent=11 // pred_fallthru
          _
      $region12: #{tpu_custom_call.1} parent=5 // pred_fallthru
        _
      %p143 = scmp.lt.s32.totalorder %s12, 2
      // Predicated region
      $region21: #{tpu_custom_call.1} parent=5 // pred_check
        %p144 = pneg %p143
      $region22: #{tpu_custom_call.1} parent=5 // pred_check_branch
        %146 = sbr.rel (%p144) target = $region24
      $region23: #{tpu_custom_call.1} parent=5 // pred_region
        // Predicated region
        $region25: #{tpu_custom_call.1} parent=23 // pred_check
          %p147 = pneg %p46
        $region26: #{tpu_custom_call.1} parent=23 // pred_check_branch
          %149 = sbr.rel (%p147) target = $region28
        $region27: #{tpu_custom_call.1} parent=23 // pred_region
          %s150 = smul.u32 2, %s20
          %p151 = scmp.lt.s32.totalorder %s19, 1
          %s152 = scalar_select %p151, %s19, 1
          %p153 = scmp.lt.s32.totalorder %s150, 1
          %s154 = scalar_select %p153, %s150, 1
          %s155 = smul.addr %s152, 2
          %s156 = sadd.s32 %s154, %s155
          %s157 = smul.addr %s156, 4
          %s158 = scalar_lea.vmem %s0, %s157
          %s159 = smul.u32 2, %s20
        $region28: #{tpu_custom_call.1} parent=23 // pred_fallthru
          _
      $region24: #{tpu_custom_call.1} parent=5 // pred_fallthru
        _
      %p160 = scmp.le.s32.totalorder 1, %s12
      %p161 = scmp.lt.s32.totalorder %s12, 3
      %p162 = pnand %p160, %p161
      %p163 = pneg %p162
      // Predicated region
      $region29: #{tpu_custom_call.1} parent=5 // pred_check
        _
      $region30: #{tpu_custom_call.1} parent=5 // pred_check_branch
        %165 = sbr.rel (%p162) target = $region32
      $region31: #{tpu_custom_call.1} parent=5 // pred_region
        %s166 = ssub.s32 %s12, 1
        %s167 = smul.u32 2, %s22
        %p168 = scmp.lt.s32.totalorder %s21, 1
        %s169 = scalar_select %p168, %s21, 1
        %p170 = scmp.lt.s32.totalorder %s167, 1
        %s171 = scalar_select %p170, %s167, 1
        %s172 = smul.addr %s169, 2
        %s173 = sadd.s32 %s171, %s172
        %s174 = smul.addr %s173, 4
        %s175 = scalar_lea.vmem %s0, %s174
        %p176 = pneg %p52
        %p177 = pneg %p49
        %p178 = pneg %p73
        %p179 = pneg %p70
        %p180 = pneg %p94
        %p181 = pneg %p91
        %p182 = pneg %p122
        %p183 = pneg %p119
        %s184 = sand.u32 %s109, 1
        %s185 = scalar_lea.sflag [#allocation3], %s184
        %s186 = sand.u32 %s109, 1
        %s187 = smul.addr %s186, 16
        %s188 = scalar_lea.vmem [#allocation2], %s187
        %s189 = smul.u32 2, %s22
        %p190 = scmp.lt.s32.totalorder %s21, 1
        %s191 = scalar_select %p190, %s21, 1
        %p192 = scmp.lt.s32.totalorder %s189, 1
        %s193 = scalar_select %p192, %s189, 1
        %s194 = smul.addr %s191, 2
        %s195 = sadd.s32 %s193, %s194
        %s196 = smul.addr %s195, 4
        %s197 = scalar_lea.vmem %s0, %s196
        %s198 = smul.u32 2, %s22
        %s199 = smul.u32 2, %s22
        %v200 = vld [vmem:[%s197] sm:$0xff]
        %v201 = vld [vmem:[%s1] sm:$0xff]
        %203 = vset.pattern.permute.xlu0 0
        %204 = vperm.xlu0 %203, %v201
        %v205 = vpop.permute.xlu0 %204
        %v208 = vlaneseq
        %v209 = vshrl.u32 %v208, 7
        %v210 = vsub.s32 0, %v209
        %v211 = vrot.slane %v200, %v210
        %v212 = vlaneseq
        %v213 = vshrl.u32 %v212, 7
        %v214 = vsub.s32 4, %v213
        %v215 = vrot.slane %v200, %v214
        %v218 = vlaneseq
        %v219 = vshrl.u32 %v218, 7
        %v220 = vsub.s32 0, %v219
        %v221 = vrot.slane %v211, %v220
        %v222 = vlaneseq
        %v223 = vshrl.u32 %v222, 7
        %v224 = vsub.s32 0, %v223
        %v225 = vrot.slane %v215, %v224
        %v226 = vmul.f32 %v205, %v221
        %v227 = vmul.f32 %v205, %v225
        %v228 = vadd.f32 %v226, 0.0
        %v229 = vadd.f32 %v227, 0.0
        %230 = vset.pattern.permute.xlu0 1
        %231 = vperm.xlu0 %230, %v201
        %v232 = vpop.permute.xlu0 %231
        %v234 = vlaneseq
        %v235 = vshrl.u32 %v234, 7
        %v236 = vsub.s32 1, %v235
        %v237 = vrot.slane %v200, %v236
        %v238 = vlaneseq
        %v239 = vshrl.u32 %v238, 7
        %v240 = vsub.s32 5, %v239
        %v241 = vrot.slane %v200, %v240
        %v244 = vlaneseq
        %v245 = vshrl.u32 %v244, 7
        %v246 = vsub.s32 1, %v245
        %v247 = vrot.slane %v237, %v246
        %v248 = vlaneseq
        %v249 = vshrl.u32 %v248, 7
        %v250 = vsub.s32 1, %v249
        %v251 = vrot.slane %v241, %v250
        %v252 = vmul.f32 %v232, %v247
        %v253 = vmul.f32 %v232, %v251
        %v254 = vadd.f32 %v252, 0.0
        %v255 = vadd.f32 %v253, 0.0
        %256 = vset.pattern.permute.xlu0 2
        %257 = vperm.xlu0 %256, %v201
        %v258 = vpop.permute.xlu0 %257
        %v260 = vlaneseq
        %v261 = vshrl.u32 %v260, 7
        %v262 = vsub.s32 2, %v261
        %v263 = vrot.slane %v200, %v262
        %v264 = vlaneseq
        %v265 = vshrl.u32 %v264, 7
        %v266 = vsub.s32 6, %v265
        %v267 = vrot.slane %v200, %v266
        %v270 = vlaneseq
        %v271 = vshrl.u32 %v270, 7
        %v272 = vsub.s32 2, %v271
        %v273 = vrot.slane %v263, %v272
        %v274 = vlaneseq
        %v275 = vshrl.u32 %v274, 7
        %v276 = vsub.s32 2, %v275
        %v277 = vrot.slane %v267, %v276
        %v278 = vmul.f32 %v258, %v273
        %v279 = vmul.f32 %v258, %v277
        %v280 = vadd.f32 %v228, %v278
        %v281 = vadd.f32 %v229, %v279
        %282 = vset.pattern.permute.xlu0 3
        %283 = vperm.xlu0 %282, %v201
        %v284 = vpop.permute.xlu0 %283
        %v286 = vlaneseq
        %v287 = vshrl.u32 %v286, 7
        %v288 = vsub.s32 3, %v287
        %v289 = vrot.slane %v200, %v288
        %v290 = vlaneseq
        %v291 = vshrl.u32 %v290, 7
        %v292 = vsub.s32 7, %v291
        %v293 = vrot.slane %v200, %v292
        %v296 = vlaneseq
        %v297 = vshrl.u32 %v296, 7
        %v298 = vsub.s32 3, %v297
        %v299 = vrot.slane %v289, %v298
        %v300 = vlaneseq
        %v301 = vshrl.u32 %v300, 7
        %v302 = vsub.s32 3, %v301
        %v303 = vrot.slane %v293, %v302
        %v304 = vmul.f32 %v284, %v299
        %v305 = vmul.f32 %v284, %v303
        %v306 = vadd.f32 %v254, %v304
        %v307 = vadd.f32 %v255, %v305
        %v308 = vadd.f32 %v280, %v306
        %v309 = vadd.f32 %v281, %v307
        %v310 = vld [vmem:[%s2] sm:$0xff]
        %312 = vset.pattern.permute.xlu0 0
        %313 = vperm.xlu0 %312, %v310
        %v314 = vpop.permute.xlu0 %313
        %v316 = vadd.f32 %v308, %v314
        %v317 = vadd.f32 %v309, %v314
        %v318 = vmax.f32 %v316, 0.0
        %v319 = vmax.f32 %v317, 0.0
        %320 = vst [vmem:[%s188] sm:$0xff] %v318
        %321 = vst [vmem:[%s188 + $0x8] sm:$0xff] %v319
        %s322 = sand.u32 %s109, 1
        %s323 = scalar_lea.sflag [#allocation3], %s322
        %s324 = sand.u32 %s109, 1
        %s325 = smul.addr %s324, 16
        %s326 = scalar_lea.vmem [#allocation2], %s325
        // Predicated region
        $region33: #{tpu_custom_call.1} parent=31 // pred_check
          %p327 = pneg %p119
        $region34: #{tpu_custom_call.1} parent=31 // pred_check_branch
          %329 = sbr.rel (%p327) target = $region36
        $region35: #{tpu_custom_call.1} parent=31 // pred_region
          %s330 = smul.u32 2, %s22
          %s332 = ssub.s32 256, 256
          %333 = vsyncadd %s323, %s332
          %s334 = smul.addr %s21, 2
          %s335 = sadd.s32 %s330, %s334
          %s336 = smul.addr %s335, 128
          %s337 = scalar_lea.hbm %s3, %s336
          %s339 = sshll.u32 %s326, 4
          %s340 = int_to_ptr.vmem [resolvable:$true] %s339
          %342 = dma.vmem_to_hbm [thread:$0]  %s340, 256, %s337, %s323
        $region36: #{tpu_custom_call.1} parent=31 // pred_fallthru
          _
      $region32: #{tpu_custom_call.1} parent=5 // pred_fallthru
        _
      %p343 = scmp.le.s32.totalorder 2, %s12
      // Predicated region
      $region37: #{tpu_custom_call.1} parent=5 // pred_check
        %p344 = pneg %p343
      $region38: #{tpu_custom_call.1} parent=5 // pred_check_branch
        %346 = sbr.rel (%p344) target = $region40
      $region39: #{tpu_custom_call.1} parent=5 // pred_region
        %s347 = ssub.s32 %s12, 2
        // Predicated region
        $region41: #{tpu_custom_call.1} parent=39 // pred_check
          %p348 = pneg %p125
        $region42: #{tpu_custom_call.1} parent=39 // pred_check_branch
          %350 = sbr.rel (%p348) target = $region44
        $region43: #{tpu_custom_call.1} parent=39 // pred_region
          %s351 = sand.u32 %s110, 1
          %s352 = scalar_lea.sflag [#allocation3], %s351
          %s353 = sand.u32 %s110, 1
          %s354 = smul.addr %s353, 16
          %s355 = scalar_lea.vmem [#allocation2], %s354
          %356 = dma.done %s352, 256
        $region44: #{tpu_custom_call.1} parent=39 // pred_fallthru
          _
      $region40: #{tpu_custom_call.1} parent=5 // pred_fallthru
        _
    $region6: #{tpu_custom_call.1} parent=1 // loop_footer
      %s16 = sadd.s32 1, %s12
    $region7: #{tpu_custom_call.1} parent=1 // loop_footer_branch
      %11 = sbr.rel target = $region3
    $region8: #{tpu_custom_call.1} parent=1 // loop_exit
      _
    %357 = vsyncpa [#allocation3], 1
    %s358 = scalar_lea.sflag [#allocation3], 1
    %359 = vsyncpa %s358, 1

</llo_original>
